<compile_context>
chip_gen: v7x
topology: tpu7x:2x2x1
jax: 0.10.0
libtpu: 0.0.40
codegen_flags: <defaults>
</compile_context>

<pallas_src>
import numpy as np

import jax
import jax.numpy as jnp
from jax.experimental import pallas as pl
from jax.experimental.pallas import tpu as pltpu

# ---- model hyper-parameters (from args in __init__) ----
INPUT_DIM = 32          # args.eann_input_dim
HIDDEN_DIM = 32         # args.eann_hidden_dim
EVENT_NUM = 4           # args.eann_event_num
OUTPUT_DIM = 2          # args.output_dim_of_pattern_based_model
MAX_SEQ_LEN = 8         # args.eann_input_max_sequence_length
FILTER_NUM = 20
WINDOW_SIZES = (1, 2, 3, 4)
WMAX = max(WINDOW_SIZES)

NF_PAD = 128            # conv output lanes: 4 windows * 20 filters = 80 -> pad to 128
OUT_W = 8               # packed head output lanes: det (2) + dis (4) + zero padding
BATCH_TILE = 512        # rows per grid step (~10 MiB VMEM incl. double buffers)


def eann_text_kernel(tok_ref, mask_ref,
                     w_conv_ref, b_conv_ref, valid_ref,
                     w_fc_ref, b_fc_ref,
                     w_h1_ref, b_h1_ref, w_h2_ref, b_h2_ref,
                     out_ref):
    f32, bf16 = jnp.float32, jnp.bfloat16
    TB, L, D = tok_ref.shape
    NF = w_conv_ref.shape[1]                # 128 (4*FILTER_NUM padded to full lanes)
    wmax = w_conv_ref.shape[0] // D         # 4 (largest conv window)
    NP = out_ref.shape[-1]                  # 8 packed output lanes

    # text = tokens_features * masks[:, :, None]  (mask is 0/1 -> exact)
    text = tok_ref[...].astype(f32) * mask_ref[...].astype(f32)        # (TB, L, D)

    # In-kernel im2col: X[:, t, k*D:(k+1)*D] = text[:, t+k, :]  (zero past L).
    textp = jnp.concatenate(
        [text, jnp.zeros((TB, wmax - 1, D), f32)], axis=1)             # (TB, L+3, D)
    x = jnp.concatenate([textp[:, k:k + L, :] for k in range(wmax)],
                        axis=-1)                                       # (TB, L, 4*D)
    x = x.reshape(TB * L, wmax * D).astype(bf16)                       # (TB*L, 128)

    # All four conv window sizes in one lane-dense bf16 MXU matmul (f32 acc).
    y = jnp.dot(x, w_conv_ref[...], preferred_element_type=f32)        # (TB*L, NF)
    y = y.reshape(TB, L, NF)
    y = jnp.maximum(y + b_conv_ref[...][None, :, :], 0.0)              # conv bias + ReLU
    y = y * valid_ref[...][None, :, :]      # zero positions past each window's range
    pooled = jnp.max(y, axis=1)             # global max-pool over time -> (TB, NF)

    # text = relu(fc_cnn(cat(...)))  -- padded rows of w_fc are zero.
    h = jnp.maximum(
        jnp.dot(pooled.astype(bf16), w_fc_ref[...],
                preferred_element_type=f32) + b_fc_ref[...], 0.0)      # (TB, H)

    # Both heads' first Linear fused: [det_w1 | dis_w1].
    # (nn.LeakyReLU(True) == negative_slope=1.0 == identity, as in the reference.)
    h1 = jnp.dot(h.astype(bf16), w_h1_ref[...],
                 preferred_element_type=f32) + b_h1_ref[...]           # (TB, 2H)

    # Both heads' second Linear fused into one narrow packed weight:
    # lanes 0:2 detector logits, lanes 2:6 discriminator logits, lanes 6:8 zero.
    z = jnp.dot(h1.astype(bf16), w_h2_ref[...],
                preferred_element_type=f32) + b_h2_ref[...]            # (TB, NP)

    lane = jax.lax.broadcasted_iota(jnp.int32, (1, NP), 1)
    is_det = lane < OUTPUT_DIM
    is_dis = (lane >= OUTPUT_DIM) & (lane < OUTPUT_DIM + EVENT_NUM)

    # Softmax over the 4 discriminator lanes only (grad_reverse is identity fwd).
    zs = jnp.where(is_dis, z, -1e30)
    m = jnp.max(zs, axis=1, keepdims=True)
    p = jnp.exp(zs - m)                      # exactly 0 outside the dis lanes
    s = jnp.sum(p, axis=1, keepdims=True)
    inv = pl.reciprocal(s, approx=True)      # EUP reciprocal ...
    inv = inv * (2.0 - s * inv)              # ... + one Newton step -> f32 accurate
    dis = p * inv

    # Single packed (TB, 8) f32 store; the wrapper slices det / dis.
    out_ref[...] = jnp.where(is_det, z, dis)


def init_params(key):
    """Deterministic synthetic parameters (shapes implied by __init__)."""
    ks = jax.random.split(key, 16)
    params = {}
    # Conv2d(1, 20, (K, input_dim)) -> stored as (K, D, F)
    for i, K in enumerate(WINDOW_SIZES):
        params[f"conv{K}_w"] = (jax.random.normal(ks[i], (K, INPUT_DIM, FILTER_NUM),
                                                  jnp.float32) * 0.05)
        params[f"conv{K}_b"] = (jax.random.normal(ks[4 + i], (1, FILTER_NUM),
                                                  jnp.float32) * 0.05)
    # fc_cnn: Linear(80, hidden) stored as (in, out)
    params["fc_w"] = jax.random.normal(ks[8], (FILTER_NUM * len(WINDOW_SIZES), HIDDEN_DIM),
                                       jnp.float32) * 0.05
    params["fc_b"] = jax.random.normal(ks[9], (1, HIDDEN_DIM), jnp.float32) * 0.05
    # fake_news_detector
    params["det_w1"] = jax.random.normal(ks[10], (HIDDEN_DIM, HIDDEN_DIM), jnp.float32) * 0.05
    params["det_b1"] = jax.random.normal(ks[11], (1, HIDDEN_DIM), jnp.float32) * 0.05
    params["det_w2"] = jax.random.normal(ks[12], (HIDDEN_DIM, OUTPUT_DIM), jnp.float32) * 0.05
    params["det_b2"] = jax.random.normal(ks[13], (1, OUTPUT_DIM), jnp.float32) * 0.05
    # event_discriminator
    params["dis_w1"] = jax.random.normal(ks[14], (HIDDEN_DIM, HIDDEN_DIM), jnp.float32) * 0.05
    params["dis_b1"] = jnp.zeros((1, HIDDEN_DIM), jnp.float32)
    params["dis_w2"] = jax.random.normal(ks[15], (HIDDEN_DIM, EVENT_NUM), jnp.float32) * 0.05
    params["dis_b2"] = jnp.zeros((1, EVENT_NUM), jnp.float32)
    return params


def prepare_fused_params(params):
    """Fold per-window conv weights, fc_cnn and both heads into the padded,
    lane-dense layouts the kernel consumes.  Built once, outside jit."""
    D, F, H, L = INPUT_DIM, FILTER_NUM, HIDDEN_DIM, MAX_SEQ_LEN
    NW = len(WINDOW_SIZES)

    w_conv = np.zeros((WMAX * D, NF_PAD), np.float32)
    b_conv = np.zeros((1, NF_PAD), np.float32)
    conv_valid = np.zeros((L, NF_PAD), np.float32)
    for i, K in enumerate(WINDOW_SIZES):
        wk = np.asarray(params[f"conv{K}_w"], np.float32)          # (K, D, F)
        w_conv[:K * D, i * F:(i + 1) * F] = wk.reshape(K * D, F)
        b_conv[:, i * F:(i + 1) * F] = np.asarray(params[f"conv{K}_b"], np.float32)
        conv_valid[:L - K + 1, i * F:(i + 1) * F] = 1.0             # valid conv positions

    w_fc = np.zeros((NF_PAD, H), np.float32)
    w_fc[:NW * F, :] = np.asarray(params["fc_w"], np.float32)

    w_h1 = np.concatenate([np.asarray(params["det_w1"], np.float32),
                           np.asarray(params["dis_w1"], np.float32)], axis=1)   # (H, 2H)
    b_h1 = np.concatenate([np.asarray(params["det_b1"], np.float32),
                           np.asarray(params["dis_b1"], np.float32)], axis=1)   # (1, 2H)

    w_h2 = np.zeros((2 * H, OUT_W), np.float32)
    b_h2 = np.zeros((1, OUT_W), np.float32)
    w_h2[:H, :OUTPUT_DIM] = np.asarray(params["det_w2"], np.float32)
    w_h2[H:, OUTPUT_DIM:OUTPUT_DIM + EVENT_NUM] = np.asarray(params["dis_w2"], np.float32)
    b_h2[:, :OUTPUT_DIM] = np.asarray(params["det_b2"], np.float32)
    b_h2[:, OUTPUT_DIM:OUTPUT_DIM + EVENT_NUM] = np.asarray(params["dis_b2"], np.float32)

    return {
        "w_conv": jnp.asarray(w_conv, jnp.bfloat16),   # bf16 MXU operands, f32 accumulate
        "b_conv": jnp.asarray(b_conv),
        "conv_valid": jnp.asarray(conv_valid),
        "w_fc": jnp.asarray(w_fc, jnp.bfloat16),
        "b_fc": jnp.asarray(params["fc_b"], jnp.float32),
        "w_h1": jnp.asarray(w_h1, jnp.bfloat16),
        "b_h1": jnp.asarray(b_h1),
        "w_h2": jnp.asarray(w_h2, jnp.bfloat16),
        "b_h2": jnp.asarray(b_h2),
    }


@jax.jit
def eann_text_forward(tokens_features, masks, fused):
    B, L, D = tokens_features.shape
    TB = min(B, BATCH_TILE)                 # batch tile (full array when B is small)
    grid = (pl.cdiv(B, TB),)
    masks3 = masks.reshape(B, L, 1)

    const2 = lambda i: (0, 0)
    in_specs = [
        pl.BlockSpec((TB, L, D), lambda i: (i, 0, 0)),     # tokens (batch-tiled)
        pl.BlockSpec((TB, L, 1), lambda i: (i, 0, 0)),     # masks  (batch-tiled)
        pl.BlockSpec(fused["w_conv"].shape, const2),       # weights: resident blocks
        pl.BlockSpec(fused["b_conv"].shape, const2),
        pl.BlockSpec(fused["conv_valid"].shape, const2),
        pl.BlockSpec(fused["w_fc"].shape, const2),
        pl.BlockSpec(fused["b_fc"].shape, const2),
        pl.BlockSpec(fused["w_h1"].shape, const2),
        pl.BlockSpec(fused["b_h1"].shape, const2),
        pl.BlockSpec(fused["w_h2"].shape, const2),
        pl.BlockSpec(fused["b_h2"].shape, const2),
    ]
    out_specs = pl.BlockSpec((TB, OUT_W), lambda i: (i, 0))

    weight_bytes = sum(int(v.size) * v.dtype.itemsize for v in fused.values())
    cost = pl.CostEstimate(
        flops=2 * B * (L * (WMAX * INPUT_DIM) * NF_PAD
                       + NF_PAD * HIDDEN_DIM
                       + HIDDEN_DIM * 2 * HIDDEN_DIM
                       + 2 * HIDDEN_DIM * OUT_W),
        transcendentals=B * OUT_W,
        bytes_accessed=(int(tokens_features.size) * tokens_features.dtype.itemsize
                        + int(masks3.size) * masks3.dtype.itemsize
                        + B * OUT_W * 4 + weight_bytes),
    )

    out = pl.pallas_call(
        eann_text_kernel,
        out_shape=jax.ShapeDtypeStruct((B, OUT_W), jnp.float32),
        grid=grid,
        in_specs=in_specs,
        out_specs=out_specs,
        compiler_params=pltpu.CompilerParams(
            dimension_semantics=("parallel",),     # shard batch tiles across TCs (v7x)
            vmem_limit_bytes=48 * 1024 * 1024),
        cost_estimate=cost,
    )(tokens_features, masks3,
      fused["w_conv"], fused["b_conv"], fused["conv_valid"],
      fused["w_fc"], fused["b_fc"],
      fused["w_h1"], fused["b_h1"], fused["w_h2"], fused["b_h2"])

    detector_output = out[:, :OUTPUT_DIM]
    discriminator_output = out[:, OUTPUT_DIM:OUTPUT_DIM + EVENT_NUM]
    return detector_output, discriminator_output


def eann_text_reference(tokens_features_f32, masks, params):
    """Pure-JAX reference of the PyTorch forward, with the same bf16-operand /
    f32-accumulation matmul policy as the kernel."""
    bf16, f32 = jnp.bfloat16, jnp.float32
    text = (tokens_features_f32.astype(bf16) * masks[:, :, None].astype(bf16))
    B, L, D = text.shape
    feats = []
    for K in WINDOW_SIZES:
        w = params[f"conv{K}_w"].astype(bf16)            # (K, D, F)
        b = params[f"conv{K}_b"]
        valid = L - K + 1
        acc = jnp.zeros((B, valid, FILTER_NUM), f32)
        for k in range(K):
            acc = acc + jax.lax.dot_general(
                text[:, k:k + valid, :], w[k],
                dimension_numbers=(((2,), (0,)), ((), ())),
                preferred_element_type=f32)
        acc = jax.nn.relu(acc + b[None, :, :])
        feats.append(jnp.max(acc, axis=1))
    feat = jnp.concatenate(feats, axis=1)                # (B, 80)
    h = jax.nn.relu(jnp.dot(feat.astype(bf16), params["fc_w"].astype(bf16),
                            preferred_element_type=f32) + params["fc_b"])
    hb = h.astype(bf16)
    # LeakyReLU(negative_slope=True == 1.0) is the identity.
    d1 = jnp.dot(hb, params["det_w1"].astype(bf16),
                 preferred_element_type=f32) + params["det_b1"]
    det = jnp.dot(d1.astype(bf16), params["det_w2"].astype(bf16),
                  preferred_element_type=f32) + params["det_b2"]
    e1 = jnp.dot(hb, params["dis_w1"].astype(bf16),
                 preferred_element_type=f32) + params["dis_b1"]
    logits = jnp.dot(e1.astype(bf16), params["dis_w2"].astype(bf16),
                     preferred_element_type=f32) + params["dis_b2"]
    dis = jax.nn.softmax(logits, axis=1)
    return det, dis


if __name__ == "__main__":
    key = jax.random.PRNGKey(0)
    k_tok, k_mask, k_params = jax.random.split(key, 3)

    B, L, D = 4, MAX_SEQ_LEN, INPUT_DIM
    tokens_f32 = jax.random.normal(k_tok, (B, L, D), jnp.float32)
    masks = (jax.random.uniform(k_mask, (B, L)) > 0.2).astype(jnp.float32)

    params = init_params(k_params)
    fused = prepare_fused_params(params)

    # bf16 token features halve the dominant HBM read (feed bf16 embeddings
    # directly in production); all matmuls accumulate in f32.
    tokens = tokens_f32.astype(jnp.bfloat16)

    det_out, dis_out = eann_text_forward(tokens, masks, fused)
    jax.block_until_ready((det_out, dis_out))

    det_ref, dis_ref = eann_text_reference(tokens_f32, masks, params)
    assert jnp.allclose(det_out, det_ref, rtol=1e-3, atol=1e-3), "detector mismatch"
    assert jnp.allclose(dis_out, dis_ref, rtol=2e-3, atol=2e-3), "discriminator mismatch"
    assert abs(float(jnp.sum(dis_out)) - B) < 1e-2       # softmax rows sum to 1

    print("KERNEL_OK")
</pallas_src>

<mosaic_0001>
module attributes {stable_mosaic.version = 11 : i64} {
  func.func @eann_text_kernel(%arg0: i32, %arg1: memref<4x8x32xbf16, #tpu.memory_space<vmem>>, %arg2: memref<4x8x1xf32, #tpu.memory_space<vmem>>, %arg3: memref<128x128xbf16, #tpu.memory_space<vmem>>, %arg4: memref<1x128xf32, #tpu.memory_space<vmem>>, %arg5: memref<8x128xf32, #tpu.memory_space<vmem>>, %arg6: memref<128x32xbf16, #tpu.memory_space<vmem>>, %arg7: memref<1x32xf32, #tpu.memory_space<vmem>>, %arg8: memref<32x64xbf16, #tpu.memory_space<vmem>>, %arg9: memref<1x64xf32, #tpu.memory_space<vmem>>, %arg10: memref<64x8xbf16, #tpu.memory_space<vmem>>, %arg11: memref<1x8xf32, #tpu.memory_space<vmem>>, %arg12: memref<4x8xf32, #tpu.memory_space<vmem>>) attributes {dimension_semantics = [#tpu.dimension_semantics<parallel>], iteration_bounds = array<i64: 1>, scalar_prefetch = 0 : i64, scratch_operands = 0 : i64, tpu.core_type = #tpu.core_type<tc>, window_params = [{transform_indices = @transform_0, window_bounds = array<i64: 4, 8, 32>}, {transform_indices = @transform_1, window_bounds = array<i64: 4, 8, 1>}, {pipeline_mode = #tpu.pipeline_mode<synchronous>, transform_indices = @transform_2, window_bounds = array<i64: 128, 128>}, {pipeline_mode = #tpu.pipeline_mode<synchronous>, transform_indices = @transform_3, window_bounds = array<i64: 1, 128>}, {pipeline_mode = #tpu.pipeline_mode<synchronous>, transform_indices = @transform_4, window_bounds = array<i64: 8, 128>}, {pipeline_mode = #tpu.pipeline_mode<synchronous>, transform_indices = @transform_5, window_bounds = array<i64: 128, 32>}, {pipeline_mode = #tpu.pipeline_mode<synchronous>, transform_indices = @transform_6, window_bounds = array<i64: 1, 32>}, {pipeline_mode = #tpu.pipeline_mode<synchronous>, transform_indices = @transform_7, window_bounds = array<i64: 32, 64>}, {pipeline_mode = #tpu.pipeline_mode<synchronous>, transform_indices = @transform_8, window_bounds = array<i64: 1, 64>}, {pipeline_mode = #tpu.pipeline_mode<synchronous>, transform_indices = @transform_9, window_bounds = array<i64: 64, 8>}, {pipeline_mode = #tpu.pipeline_mode<synchronous>, transform_indices = @transform_10, window_bounds = array<i64: 1, 8>}, {transform_indices = @transform_11, window_bounds = array<i64: 4, 8>}]} {
    %c0 = arith.constant 0 : index
    %c0_0 = arith.constant 0 : index
    %c0_1 = arith.constant 0 : index
    %0 = vector.load %arg1[%c0, %c0_0, %c0_1] : memref<4x8x32xbf16, #tpu.memory_space<vmem>>, vector<4x8x32xbf16>
    %1 = arith.extf %0 : vector<4x8x32xbf16> to vector<4x8x32xf32>
    %c0_2 = arith.constant 0 : index
    %c0_3 = arith.constant 0 : index
    %c0_4 = arith.constant 0 : index
    %2 = vector.load %arg2[%c0_2, %c0_3, %c0_4] : memref<4x8x1xf32, #tpu.memory_space<vmem>>, vector<4x8x1xf32>
    %3 = vector.broadcast %2 : vector<4x8x1xf32> to vector<4x8x32xf32>
    %4 = arith.mulf %1, %3 : vector<4x8x32xf32>
    %cst = arith.constant 0.000000e+00 : f32
    %5 = vector.broadcast %cst : f32 to vector<4x3x32xf32>
    %6 = tpu.concatenate %4, %5 in 1 : vector<4x8x32xf32>, vector<4x3x32xf32> -> vector<4x11x32xf32>
    %7 = vector.extract_strided_slice %6 {offsets = [0, 0, 0], sizes = [4, 8, 32], strides = [1, 1, 1]} : vector<4x11x32xf32> to vector<4x8x32xf32>
    %8 = vector.extract_strided_slice %6 {offsets = [0, 1, 0], sizes = [4, 8, 32], strides = [1, 1, 1]} : vector<4x11x32xf32> to vector<4x8x32xf32>
    %9 = vector.extract_strided_slice %6 {offsets = [0, 2, 0], sizes = [4, 8, 32], strides = [1, 1, 1]} : vector<4x11x32xf32> to vector<4x8x32xf32>
    %10 = vector.extract_strided_slice %6 {offsets = [0, 3, 0], sizes = [4, 8, 32], strides = [1, 1, 1]} : vector<4x11x32xf32> to vector<4x8x32xf32>
    %11 = tpu.concatenate %7, %8, %9, %10 in 2 : vector<4x8x32xf32>, vector<4x8x32xf32>, vector<4x8x32xf32>, vector<4x8x32xf32> -> vector<4x8x128xf32>
    %12 = vector.shape_cast %11 : vector<4x8x128xf32> to vector<32x128xf32>
    %13 = arith.truncf %12 : vector<32x128xf32> to vector<32x128xbf16>
    %c0_5 = arith.constant 0 : index
    %c0_6 = arith.constant 0 : index
    %14 = vector.load %arg3[%c0_5, %c0_6] : memref<128x128xbf16, #tpu.memory_space<vmem>>, vector<128x128xbf16>
    %cst_7 = arith.constant dense<0.000000e+00> : vector<32x128xf32>
    %15 = tpu.matmul %13, %14, %cst_7 {dimension_numbers = #tpu.dot_dimension_numbers<[1], [0], [0], [1], [0, 0, 1, 1], [], []>} : vector<32x128xbf16>, vector<128x128xbf16>, vector<32x128xf32> -> vector<32x128xf32>
    %16 = vector.shape_cast %15 : vector<32x128xf32> to vector<4x8x128xf32>
    %c0_8 = arith.constant 0 : index
    %c0_9 = arith.constant 0 : index
    %17 = vector.load %arg4[%c0_8, %c0_9] : memref<1x128xf32, #tpu.memory_space<vmem>>, vector<1x128xf32>
    %18 = vector.shape_cast %17 : vector<1x128xf32> to vector<1x1x128xf32>
    %19 = vector.broadcast %18 : vector<1x1x128xf32> to vector<4x8x128xf32>
    %20 = arith.addf %16, %19 : vector<4x8x128xf32>
    %cst_10 = arith.constant 0.000000e+00 : f32
    %21 = vector.broadcast %cst_10 : f32 to vector<4x8x128xf32>
    %22 = arith.maximumf %20, %21 : vector<4x8x128xf32>
    %c0_11 = arith.constant 0 : index
    %c0_12 = arith.constant 0 : index
    %23 = vector.load %arg5[%c0_11, %c0_12] : memref<8x128xf32, #tpu.memory_space<vmem>>, vector<8x128xf32>
    %24 = vector.shape_cast %23 : vector<8x128xf32> to vector<1x8x128xf32>
    %25 = vector.broadcast %24 : vector<1x8x128xf32> to vector<4x8x128xf32>
    %26 = arith.mulf %22, %25 : vector<4x8x128xf32>
    %cst_13 = arith.constant dense<0xFF800000> : vector<4x128xf32>
    %27 = vector.multi_reduction <maximumf>, %26, %cst_13 [1] : vector<4x8x128xf32> to vector<4x128xf32>
    %28 = arith.truncf %27 : vector<4x128xf32> to vector<4x128xbf16>
    %c0_14 = arith.constant 0 : index
    %c0_15 = arith.constant 0 : index
    %29 = vector.load %arg6[%c0_14, %c0_15] : memref<128x32xbf16, #tpu.memory_space<vmem>>, vector<128x32xbf16>
    %cst_16 = arith.constant dense<0.000000e+00> : vector<4x32xf32>
    %30 = tpu.matmul %28, %29, %cst_16 {dimension_numbers = #tpu.dot_dimension_numbers<[1], [0], [0], [1], [0, 0, 1, 1], [], []>} : vector<4x128xbf16>, vector<128x32xbf16>, vector<4x32xf32> -> vector<4x32xf32>
    %c0_17 = arith.constant 0 : index
    %c0_18 = arith.constant 0 : index
    %31 = vector.load %arg7[%c0_17, %c0_18] : memref<1x32xf32, #tpu.memory_space<vmem>>, vector<1x32xf32>
    %32 = vector.broadcast %31 : vector<1x32xf32> to vector<4x32xf32>
    %33 = arith.addf %30, %32 : vector<4x32xf32>
    %cst_19 = arith.constant 0.000000e+00 : f32
    %34 = vector.broadcast %cst_19 : f32 to vector<4x32xf32>
    %35 = arith.maximumf %33, %34 : vector<4x32xf32>
    %36 = arith.truncf %35 : vector<4x32xf32> to vector<4x32xbf16>
    %c0_20 = arith.constant 0 : index
    %c0_21 = arith.constant 0 : index
    %37 = vector.load %arg8[%c0_20, %c0_21] : memref<32x64xbf16, #tpu.memory_space<vmem>>, vector<32x64xbf16>
    %cst_22 = arith.constant dense<0.000000e+00> : vector<4x64xf32>
    %38 = tpu.matmul %36, %37, %cst_22 {dimension_numbers = #tpu.dot_dimension_numbers<[1], [0], [0], [1], [0, 0, 1, 1], [], []>} : vector<4x32xbf16>, vector<32x64xbf16>, vector<4x64xf32> -> vector<4x64xf32>
    %c0_23 = arith.constant 0 : index
    %c0_24 = arith.constant 0 : index
    %39 = vector.load %arg9[%c0_23, %c0_24] : memref<1x64xf32, #tpu.memory_space<vmem>>, vector<1x64xf32>
    %40 = vector.broadcast %39 : vector<1x64xf32> to vector<4x64xf32>
    %41 = arith.addf %38, %40 : vector<4x64xf32>
    %42 = arith.truncf %41 : vector<4x64xf32> to vector<4x64xbf16>
    %c0_25 = arith.constant 0 : index
    %c0_26 = arith.constant 0 : index
    %43 = vector.load %arg10[%c0_25, %c0_26] : memref<64x8xbf16, #tpu.memory_space<vmem>>, vector<64x8xbf16>
    %cst_27 = arith.constant dense<0.000000e+00> : vector<4x8xf32>
    %44 = tpu.matmul %42, %43, %cst_27 {dimension_numbers = #tpu.dot_dimension_numbers<[1], [0], [0], [1], [0, 0, 1, 1], [], []>} : vector<4x64xbf16>, vector<64x8xbf16>, vector<4x8xf32> -> vector<4x8xf32>
    %c0_28 = arith.constant 0 : index
    %c0_29 = arith.constant 0 : index
    %45 = vector.load %arg11[%c0_28, %c0_29] : memref<1x8xf32, #tpu.memory_space<vmem>>, vector<1x8xf32>
    %46 = vector.broadcast %45 : vector<1x8xf32> to vector<4x8xf32>
    %47 = arith.addf %44, %46 : vector<4x8xf32>
    %48 = tpu.iota {dimensions = array<i32: 1>} : vector<1x8xi32>
    %c2_i32 = arith.constant 2 : i32
    %49 = vector.broadcast %c2_i32 : i32 to vector<1x8xi32>
    %50 = arith.cmpi slt, %48, %49 : vector<1x8xi32>
    %c2_i32_30 = arith.constant 2 : i32
    %51 = vector.broadcast %c2_i32_30 : i32 to vector<1x8xi32>
    %52 = arith.cmpi sge, %48, %51 : vector<1x8xi32>
    %c6_i32 = arith.constant 6 : i32
    %53 = vector.broadcast %c6_i32 : i32 to vector<1x8xi32>
    %54 = arith.cmpi slt, %48, %53 : vector<1x8xi32>
    %55 = arith.andi %52, %54 : vector<1x8xi1>
    %cst_31 = arith.constant -1.000000e+30 : f32
    %56 = vector.shape_cast %55 : vector<1x8xi1> to vector<1x8xi1>
    %57 = vector.broadcast %56 : vector<1x8xi1> to vector<4x8xi1>
    %58 = vector.broadcast %cst_31 : f32 to vector<4x8xf32>
    %59 = arith.select %57, %47, %58 : vector<4x8xi1>, vector<4x8xf32>
    %cst_32 = arith.constant dense<0xFF800000> : vector<4xf32>
    %60 = vector.multi_reduction <maximumf>, %59, %cst_32 [1] : vector<4x8xf32> to vector<4xf32>
    %61 = vector.shape_cast %60 : vector<4xf32> to vector<4x1xf32>
    %62 = vector.broadcast %61 : vector<4x1xf32> to vector<4x8xf32>
    %63 = arith.subf %59, %62 : vector<4x8xf32>
    %64 = math.exp %63 : vector<4x8xf32>
    %cst_33 = arith.constant dense<0.000000e+00> : vector<4xf32>
    %65 = vector.multi_reduction <add>, %64, %cst_33 [1] : vector<4x8xf32> to vector<4xf32>
    %66 = vector.shape_cast %65 : vector<4xf32> to vector<4x1xf32>
    %67 = tpu.reciprocal %66 {approx = true} : vector<4x1xf32> -> vector<4x1xf32>
    %68 = arith.mulf %66, %67 : vector<4x1xf32>
    %cst_34 = arith.constant 2.000000e+00 : f32
    %69 = vector.broadcast %cst_34 : f32 to vector<4x1xf32>
    %70 = arith.subf %69, %68 : vector<4x1xf32>
    %71 = arith.mulf %67, %70 : vector<4x1xf32>
    %72 = vector.broadcast %71 : vector<4x1xf32> to vector<4x8xf32>
    %73 = arith.mulf %64, %72 : vector<4x8xf32>
    %74 = vector.shape_cast %50 : vector<1x8xi1> to vector<1x8xi1>
    %75 = vector.broadcast %74 : vector<1x8xi1> to vector<4x8xi1>
    %76 = arith.select %75, %47, %73 : vector<4x8xi1>, vector<4x8xf32>
    %c0_35 = arith.constant 0 : index
    %c0_36 = arith.constant 0 : index
    %77 = vector.load %arg12[%c0_35, %c0_36] : memref<4x8xf32, #tpu.memory_space<vmem>>, vector<4x8xf32>
    tpu.vector_store %arg12[%c0_35, %c0_36], %76 {strides = array<i32>} : memref<4x8xf32, #tpu.memory_space<vmem>>, vector<4x8xf32>,
    return
  }
  func.func @transform_0(%arg0: i32) -> (i32, i32, i32) {
    %c0_i32 = arith.constant 0 : i32
    %c0_i32_0 = arith.constant 0 : i32
    %c0_i32_1 = arith.constant 0 : i32
    return %arg0, %c0_i32, %c0_i32_0 : i32, i32, i32
  }
  func.func @transform_1(%arg0: i32) -> (i32, i32, i32) {
    %c0_i32 = arith.constant 0 : i32
    %c0_i32_0 = arith.constant 0 : i32
    %c0_i32_1 = arith.constant 0 : i32
    return %arg0, %c0_i32, %c0_i32_0 : i32, i32, i32
  }
  func.func @transform_2(%arg0: i32) -> (i32, i32) {
    %c0_i32 = arith.constant 0 : i32
    %c0_i32_0 = arith.constant 0 : i32
    %c0_i32_1 = arith.constant 0 : i32
    return %c0_i32, %c0_i32_0 : i32, i32
  }
  func.func @transform_3(%arg0: i32) -> (i32, i32) {
    %c0_i32 = arith.constant 0 : i32
    %c0_i32_0 = arith.constant 0 : i32
    %c0_i32_1 = arith.constant 0 : i32
    return %c0_i32, %c0_i32_0 : i32, i32
  }
  func.func @transform_4(%arg0: i32) -> (i32, i32) {
    %c0_i32 = arith.constant 0 : i32
    %c0_i32_0 = arith.constant 0 : i32
    %c0_i32_1 = arith.constant 0 : i32
    return %c0_i32, %c0_i32_0 : i32, i32
  }
  func.func @transform_5(%arg0: i32) -> (i32, i32) {
    %c0_i32 = arith.constant 0 : i32
    %c0_i32_0 = arith.constant 0 : i32
    %c0_i32_1 = arith.constant 0 : i32
    return %c0_i32, %c0_i32_0 : i32, i32
  }
  func.func @transform_6(%arg0: i32) -> (i32, i32) {
    %c0_i32 = arith.constant 0 : i32
    %c0_i32_0 = arith.constant 0 : i32
    %c0_i32_1 = arith.constant 0 : i32
    return %c0_i32, %c0_i32_0 : i32, i32
  }
  func.func @transform_7(%arg0: i32) -> (i32, i32) {
    %c0_i32 = arith.constant 0 : i32
    %c0_i32_0 = arith.constant 0 : i32
    %c0_i32_1 = arith.constant 0 : i32
    return %c0_i32, %c0_i32_0 : i32, i32
  }
  func.func @transform_8(%arg0: i32) -> (i32, i32) {
    %c0_i32 = arith.constant 0 : i32
    %c0_i32_0 = arith.constant 0 : i32
    %c0_i32_1 = arith.constant 0 : i32
    return %c0_i32, %c0_i32_0 : i32, i32
  }
  func.func @transform_9(%arg0: i32) -> (i32, i32) {
    %c0_i32 = arith.constant 0 : i32
    %c0_i32_0 = arith.constant 0 : i32
    %c0_i32_1 = arith.constant 0 : i32
    return %c0_i32, %c0_i32_0 : i32, i32
  }
  func.func @transform_10(%arg0: i32) -> (i32, i32) {
    %c0_i32 = arith.constant 0 : i32
    %c0_i32_0 = arith.constant 0 : i32
    %c0_i32_1 = arith.constant 0 : i32
    return %c0_i32, %c0_i32_0 : i32, i32
  }
  func.func @transform_11(%arg0: i32) -> (i32, i32) {
    %c0_i32 = arith.constant 0 : i32
    %c0_i32_0 = arith.constant 0 : i32
    return %arg0, %c0_i32 : i32, i32
  }
}

</mosaic_0001>

<llo_original>
// kernel: eann_text_forward.1
$region0: #{eann_text_forward.1}
  #allocation0 [shape = 'u32[]', space=smem, size = 0x4, offset = 0x4, fixed_abs, tag = 'smem constant byte address 0x4 - core index']
  #allocation1 [shape = 'u32[144,128]{1,0:T(1,128)}', space=vmem, size = 0x12000, scoped, tag = 'internal scratch']
  %s0 = inlined_call_operand.vmem [shape: bf16[4,8,32], index: 0, kind: input, shape index: {}]
  %s1 = inlined_call_operand.vmem [shape: f32[4,8,1], index: 1, kind: input, shape index: {}]
  %s2 = inlined_call_operand.vmem [shape: bf16[128,128], index: 2, kind: input, shape index: {}]
  %s3 = inlined_call_operand.vmem [shape: f32[1,128], index: 3, kind: input, shape index: {}]
  %s4 = inlined_call_operand.vmem [shape: f32[8,128], index: 4, kind: input, shape index: {}]
  %s5 = inlined_call_operand.vmem [shape: bf16[128,32], index: 5, kind: input, shape index: {}]
  %s6 = inlined_call_operand.vmem [shape: f32[1,32], index: 6, kind: input, shape index: {}]
  %s7 = inlined_call_operand.vmem [shape: bf16[32,64], index: 7, kind: input, shape index: {}]
  %s8 = inlined_call_operand.vmem [shape: f32[1,64], index: 8, kind: input, shape index: {}]
  %s9 = inlined_call_operand.vmem [shape: bf16[64,8], index: 9, kind: input, shape index: {}]
  %s10 = inlined_call_operand.vmem [shape: f32[1,8], index: 10, kind: input, shape index: {}]
  %s11 = inlined_call_operand.vmem [shape: f32[4,8], index: 11, kind: output, shape index: {}]
  %s12 = sld [smem:[#allocation0]]
  $region54: #{eann_text_forward.1} parent=0
    _
  %s14 = ssub.s32 1, %s12
  %s15 = scalar_select 0, %s14, %s12
  // Predicated region
  $region2: #{eann_text_forward.1} parent=0 // pred_check
    _
  $region3: #{eann_text_forward.1} parent=0 // pred_check_branch
    %17 = sbr.rel (0) target = $region5
  $region4: #{eann_text_forward.1} parent=0 // pred_region
    _
  $region5: #{eann_text_forward.1} parent=0 // pred_fallthru
    _
  // Predicated region
  $region6: #{eann_text_forward.1} parent=0 // pred_check
    _
  $region7: #{eann_text_forward.1} parent=0 // pred_check_branch
    %19 = sbr.rel (0) target = $region9
  $region8: #{eann_text_forward.1} parent=0 // pred_region
    _
  $region9: #{eann_text_forward.1} parent=0 // pred_fallthru
    _
  // Predicated region
  $region10: #{eann_text_forward.1} parent=0 // pred_check
    _
  $region11: #{eann_text_forward.1} parent=0 // pred_check_branch
    %21 = sbr.rel (0) target = $region13
  $region12: #{eann_text_forward.1} parent=0 // pred_region
    _
  $region13: #{eann_text_forward.1} parent=0 // pred_fallthru
    _
  // Predicated region
  $region14: #{eann_text_forward.1} parent=0 // pred_check
    _
  $region15: #{eann_text_forward.1} parent=0 // pred_check_branch
    %23 = sbr.rel (0) target = $region17
  $region16: #{eann_text_forward.1} parent=0 // pred_region
    _
  $region17: #{eann_text_forward.1} parent=0 // pred_fallthru
    _
  // Predicated region
  $region18: #{eann_text_forward.1} parent=0 // pred_check
    _
  $region19: #{eann_text_forward.1} parent=0 // pred_check_branch
    %25 = sbr.rel (0) target = $region21
  $region20: #{eann_text_forward.1} parent=0 // pred_region
    _
  $region21: #{eann_text_forward.1} parent=0 // pred_fallthru
    _
  // Predicated region
  $region22: #{eann_text_forward.1} parent=0 // pred_check
    _
  $region23: #{eann_text_forward.1} parent=0 // pred_check_branch
    %27 = sbr.rel (0) target = $region25
  $region24: #{eann_text_forward.1} parent=0 // pred_region
    _
  $region25: #{eann_text_forward.1} parent=0 // pred_fallthru
    _
  // Predicated region
  $region26: #{eann_text_forward.1} parent=0 // pred_check
    _
  $region27: #{eann_text_forward.1} parent=0 // pred_check_branch
    %29 = sbr.rel (0) target = $region29
  $region28: #{eann_text_forward.1} parent=0 // pred_region
    _
  $region29: #{eann_text_forward.1} parent=0 // pred_fallthru
    _
  // Predicated region
  $region30: #{eann_text_forward.1} parent=0 // pred_check
    _
  $region31: #{eann_text_forward.1} parent=0 // pred_check_branch
    %31 = sbr.rel (0) target = $region33
  $region32: #{eann_text_forward.1} parent=0 // pred_region
    _
  $region33: #{eann_text_forward.1} parent=0 // pred_fallthru
    _
  // Predicated region
  $region34: #{eann_text_forward.1} parent=0 // pred_check
    _
  $region35: #{eann_text_forward.1} parent=0 // pred_check_branch
    %33 = sbr.rel (0) target = $region37
  $region36: #{eann_text_forward.1} parent=0 // pred_region
    _
  $region37: #{eann_text_forward.1} parent=0 // pred_fallthru
    _
  // Predicated region
  $region38: #{eann_text_forward.1} parent=0 // pred_check
    _
  $region39: #{eann_text_forward.1} parent=0 // pred_check_branch
    %35 = sbr.rel (0) target = $region41
  $region40: #{eann_text_forward.1} parent=0 // pred_region
    _
  $region41: #{eann_text_forward.1} parent=0 // pred_fallthru
    _
  // Predicated region
  $region42: #{eann_text_forward.1} parent=0 // pred_check
    _
  $region43: #{eann_text_forward.1} parent=0 // pred_check_branch
    %37 = sbr.rel (0) target = $region45
  $region44: #{eann_text_forward.1} parent=0 // pred_region
    _
  $region45: #{eann_text_forward.1} parent=0 // pred_fallthru
    _
  %v39 = vld [vmem:[%s0] sm:$0xf]
  %v40 = vld [vmem:[%s0 + $0x4] sm:$0xf]
  %v41 = vld [vmem:[%s0 + $0x8] sm:$0xf]
  %v42 = vld [vmem:[%s0 + $0xc] sm:$0xf]
  %v43 = vunpack.c.l.bf16 %v39
  %v44 = vunpack.c.l.bf16 %v40
  %v45 = vunpack.c.l.bf16 %v41
  %v46 = vunpack.c.l.bf16 %v42
  %v47 = vld [vmem:[%s1] sm:$0xff]
  %v48 = vld [vmem:[%s1 + $0x8] sm:$0xff]
  %v49 = vld [vmem:[%s1 + $0x10] sm:$0xff]
  %v50 = vld [vmem:[%s1 + $0x18] sm:$0xff]
  %52 = vset.pattern.permute.xlu0 0
  %53 = vperm.xlu0 %52, %v47
  %v54 = vpop.permute.xlu0 %53
  %57 = vset.pattern.permute.xlu0 0
  %58 = vperm.xlu0 %57, %v48
  %v59 = vpop.permute.xlu0 %58
  %62 = vset.pattern.permute.xlu0 0
  %63 = vperm.xlu0 %62, %v49
  %v64 = vpop.permute.xlu0 %63
  %67 = vset.pattern.permute.xlu0 0
  %68 = vperm.xlu0 %67, %v50
  %v69 = vpop.permute.xlu0 %68
  %v71 = vmul.f32 %v43, %v54
  %v72 = vmul.f32 %v44, %v59
  %v73 = vmul.f32 %v45, %v64
  %v74 = vmul.f32 %v46, %v69
  %vm80 = vcmask 1046528
  %v81 = vrot.slane %v71, 1
  %v82 = vrot.slane 0.0, 1
  %v83 = vsel %vm80, %v81, %v82
  %v84 = vrot.slane %v72, 1
  %v85 = vsel %vm80, %v84, %v82
  %v86 = vrot.slane %v73, 1
  %v87 = vsel %vm80, %v86, %v82
  %v88 = vrot.slane %v74, 1
  %v89 = vsel %vm80, %v88, %v82
  %90 = vrot.lane.b32.xlu0 %v83, 32
  %v91 = vpop.permute.xlu0 %90
  %92 = vrot.lane.b32.xlu0 %v85, 32
  %v93 = vpop.permute.xlu0 %92
  %94 = vrot.lane.b32.xlu0 %v87, 32
  %v95 = vpop.permute.xlu0 %94
  %96 = vrot.lane.b32.xlu0 %v89, 32
  %v97 = vpop.permute.xlu0 %96
  %vm102 = vcmask 1045504
  %v103 = vrot.slane %v71, 2
  %v104 = vrot.slane 0.0, 2
  %v105 = vsel %vm102, %v103, %v104
  %v106 = vrot.slane %v72, 2
  %v107 = vsel %vm102, %v106, %v104
  %v108 = vrot.slane %v73, 2
  %v109 = vsel %vm102, %v108, %v104
  %v110 = vrot.slane %v74, 2
  %v111 = vsel %vm102, %v110, %v104
  %112 = vrot.lane.b32.xlu0 %v105, 64
  %v113 = vpop.permute.xlu0 %112
  %114 = vrot.lane.b32.xlu0 %v107, 64
  %v115 = vpop.permute.xlu0 %114
  %116 = vrot.lane.b32.xlu0 %v109, 64
  %v117 = vpop.permute.xlu0 %116
  %118 = vrot.lane.b32.xlu0 %v111, 64
  %v119 = vpop.permute.xlu0 %118
  %vm124 = vcmask 1044480
  %v125 = vrot.slane %v71, 3
  %v126 = vrot.slane 0.0, 3
  %v127 = vsel %vm124, %v125, %v126
  %v128 = vrot.slane %v72, 3
  %v129 = vsel %vm124, %v128, %v126
  %v130 = vrot.slane %v73, 3
  %v131 = vsel %vm124, %v130, %v126
  %v132 = vrot.slane %v74, 3
  %v133 = vsel %vm124, %v132, %v126
  %134 = vrot.lane.b32.xlu0 %v127, 96
  %v135 = vpop.permute.xlu0 %134
  %136 = vrot.lane.b32.xlu0 %v129, 96
  %v137 = vpop.permute.xlu0 %136
  %138 = vrot.lane.b32.xlu0 %v131, 96
  %v139 = vpop.permute.xlu0 %138
  %140 = vrot.lane.b32.xlu0 %v133, 96
  %v141 = vpop.permute.xlu0 %140
  %vm146 = vcmask 261120
  %v147 = vsel %vm146, %v71, %v91
  %v148 = vsel %vm146, %v72, %v93
  %v149 = vsel %vm146, %v73, %v95
  %v150 = vsel %vm146, %v74, %v97
  %vm151 = vcmask 523264
  %v152 = vsel %vm151, %v147, %v113
  %v153 = vsel %vm151, %v148, %v115
  %v154 = vsel %vm151, %v149, %v117
  %v155 = vsel %vm151, %v150, %v119
  %vm156 = vcmask 785408
  %v157 = vsel %vm156, %v152, %v135
  %v158 = vsel %vm156, %v153, %v137
  %v159 = vsel %vm156, %v154, %v139
  %v160 = vsel %vm156, %v155, %v141
  %v161 = vpack.c.bf16 %v158, %v157
  %v162 = vpack.c.bf16 %v160, %v159
  %v163 = vld [vmem:[%s2] sm:$0xf]
  %v164 = vld [vmem:[%s2 + $0x4] sm:$0xf]
  %v165 = vld [vmem:[%s2 + $0x8] sm:$0xf]
  %v166 = vld [vmem:[%s2 + $0xc] sm:$0xf]
  %v167 = vld [vmem:[%s2 + $0x10] sm:$0xf]
  %v168 = vld [vmem:[%s2 + $0x14] sm:$0xf]
  %v169 = vld [vmem:[%s2 + $0x18] sm:$0xf]
  %v170 = vld [vmem:[%s2 + $0x1c] sm:$0xf]
  %v171 = vld [vmem:[%s2 + $0x20] sm:$0xf]
  %v172 = vld [vmem:[%s2 + $0x24] sm:$0xf]
  %v173 = vld [vmem:[%s2 + $0x28] sm:$0xf]
  %v174 = vld [vmem:[%s2 + $0x2c] sm:$0xf]
  %v175 = vld [vmem:[%s2 + $0x30] sm:$0xf]
  %v176 = vld [vmem:[%s2 + $0x34] sm:$0xf]
  %v177 = vld [vmem:[%s2 + $0x38] sm:$0xf]
  %v178 = vld [vmem:[%s2 + $0x3c] sm:$0xf]
  %v195 = vunpack.c.l.b16 %v163
  %v196 = vunpack.c.l.b16 %v164
  %v197 = vunpack.c.l.b16 %v165
  %v198 = vunpack.c.l.b16 %v166
  %v199 = vunpack.c.l.b16 %v167
  %v200 = vunpack.c.l.b16 %v168
  %v201 = vunpack.c.l.b16 %v169
  %v202 = vunpack.c.l.b16 %v170
  %v203 = vunpack.c.l.b16 %v171
  %v204 = vunpack.c.l.b16 %v172
  %v205 = vunpack.c.l.b16 %v173
  %v206 = vunpack.c.l.b16 %v174
  %v207 = vunpack.c.l.b16 %v175
  %v208 = vunpack.c.l.b16 %v176
  %v209 = vunpack.c.l.b16 %v177
  %v210 = vunpack.c.l.b16 %v178
  %v211 = vpack.c.b16 %v196, %v195
  %v212 = vpack.c.b16 %v198, %v197
  %v213 = vpack.c.b16 %v200, %v199
  %v214 = vpack.c.b16 %v202, %v201
  %v215 = vpack.c.b16 %v204, %v203
  %v216 = vpack.c.b16 %v206, %v205
  %v217 = vpack.c.b16 %v208, %v207
  %v218 = vpack.c.b16 %v210, %v209
  %227 = vmatprep.subr.bf16.mxu0 0
  %228 = vmatpush1.bf16.msra.mxu0 %v211
  %229 = vmatprep.subr.bf16.mxu0 0
  %230 = vmatpush1.bf16.msra.mxu0 %v212
  %231 = vmatprep.subr.bf16.mxu0 0
  %232 = vmatpush1.bf16.msra.mxu0 %v213
  %233 = vmatprep.subr.bf16.mxu0 0
  %234 = vmatpush1.bf16.msra.mxu0 %v214
  %235 = vmatprep.subr.bf16.mxu0 0
  %236 = vmatpush1.bf16.msra.mxu0 %v215
  %237 = vmatprep.subr.bf16.mxu0 0
  %238 = vmatpush1.bf16.msra.mxu0 %v216
  %239 = vmatprep.subr.bf16.mxu0 0
  %240 = vmatpush1.bf16.msra.mxu0 %v217
  %241 = vmatprep.subr.bf16.mxu0 0
  %242 = vmatpush1.bf16.msra.mxu0 %v218
  %243 = vmatprep.subr.bf16.mxu0 0
  %244 = vmatpush1.bf16.msra.mxu0 0
  %245 = vmatprep.subr.bf16.mxu0 0
  %246 = vmatpush1.bf16.msra.mxu0 0
  %247 = vmatprep.subr.bf16.mxu0 0
  %248 = vmatpush1.bf16.msra.mxu0 0
  %249 = vmatprep.subr.bf16.mxu0 0
  %250 = vmatpush1.bf16.msra.mxu0 0
  %251 = vmatprep.subr.bf16.mxu0 0
  %252 = vmatpush1.bf16.msra.mxu0 0
  %253 = vmatprep.subr.bf16.mxu0 0
  %254 = vmatpush1.bf16.msra.mxu0 0
  %255 = vmatprep.subr.bf16.mxu0 0
  %256 = vmatpush1.bf16.msra.mxu0 0
  %257 = vmatprep.subr.bf16.mxu0 0
  %258 = vmatpush1.bf16.msra.mxu0 0
  %259 = vmatprep.mubr.bf16.mxu0 0
  %260 = vmatmul.mubr.bf16.gmra.mrb[0].mxu0 %v161
  %v261 = vpop.f32.mrb[0].mxu0
  %v262 = vadd.f32 0.0, %v261
  %v263 = vpop.f32.mrb[0].mxu0
  %v264 = vpop.f32.mrb[0].mxu0
  %v265 = vadd.f32 0.0, %v264
  %v266 = vpop.f32.mrb[0].mxu0
  %267 = vmatprep.mubr.bf16.mxu0 0
  %268 = vmatmul.mubr.bf16.gmra.mrb[0].mxu0 %v162
  %v269 = vpop.f32.mrb[0].mxu0
  %v270 = vadd.f32 0.0, %v269
  %v271 = vpop.f32.mrb[0].mxu0
  %v272 = vpop.f32.mrb[0].mxu0
  %v273 = vadd.f32 0.0, %v272
  %v274 = vpop.f32.mrb[0].mxu0
  %275 = vdwg.mxu0
  %v276 = vld [vmem:[%s3] sm:$0x1]
  %v278 = vlaneseq
  %v279 = vshrl.u32 %v278, 7
  %v280 = vsub.s32 0, %v279
  %v281 = vrot.slane %v276, %v280
  %v283 = vadd.f32 %v262, %v281
  %v284 = vadd.f32 %v265, %v281
  %v285 = vadd.f32 %v270, %v281
  %v286 = vadd.f32 %v273, %v281
  %v287 = vmax.f32 %v283, 0.0
  %v288 = vmax.f32 %v284, 0.0
  %v289 = vmax.f32 %v285, 0.0
  %v290 = vmax.f32 %v286, 0.0
  %v291 = vld [vmem:[%s4] sm:$0xff]
  %v292 = vmul.f32 %v287, %v291
  %v293 = vmul.f32 %v288, %v291
  %v294 = vmul.f32 %v289, %v291
  %v295 = vmul.f32 %v290, %v291
  %v296 = vrot.slane %v292, 4
  %v297 = vmax.f32 %v292, %v296
  %v298 = vrot.slane %v297, 2
  %v299 = vmax.f32 %v297, %v298
  %v300 = vrot.slane %v299, 1
  %v301 = vmax.f32 %v299, %v300
  %v302 = vrot.slane %v293, 4
  %v303 = vmax.f32 %v293, %v302
  %v304 = vrot.slane %v303, 2
  %v305 = vmax.f32 %v303, %v304
  %v306 = vrot.slane %v305, 1
  %v307 = vmax.f32 %v305, %v306
  %v308 = vrot.slane %v294, 4
  %v309 = vmax.f32 %v294, %v308
  %v310 = vrot.slane %v309, 2
  %v311 = vmax.f32 %v309, %v310
  %v312 = vrot.slane %v311, 1
  %v313 = vmax.f32 %v311, %v312
  %v314 = vrot.slane %v295, 4
  %v315 = vmax.f32 %v295, %v314
  %v316 = vrot.slane %v315, 2
  %v317 = vmax.f32 %v315, %v316
  %v318 = vrot.slane %v317, 1
  %v319 = vmax.f32 %v317, %v318
  %v320 = vpack.c.bf16 %v301, %v301
  %v321 = vpack.c.bf16 %v307, %v307
  %v322 = vpack.c.bf16 %v313, %v313
  %v323 = vpack.c.bf16 %v319, %v319
  %v324 = vld [vmem:[%s5] sm:$0xf]
  %v325 = vld [vmem:[%s5 + $0x4] sm:$0xf]
  %v326 = vld [vmem:[%s5 + $0x8] sm:$0xf]
  %v327 = vld [vmem:[%s5 + $0xc] sm:$0xf]
  %v328 = vld [vmem:[%s5 + $0x10] sm:$0xf]
  %v329 = vld [vmem:[%s5 + $0x14] sm:$0xf]
  %v330 = vld [vmem:[%s5 + $0x18] sm:$0xf]
  %v331 = vld [vmem:[%s5 + $0x1c] sm:$0xf]
  %v332 = vld [vmem:[%s5 + $0x20] sm:$0xf]
  %v333 = vld [vmem:[%s5 + $0x24] sm:$0xf]
  %v334 = vld [vmem:[%s5 + $0x28] sm:$0xf]
  %v335 = vld [vmem:[%s5 + $0x2c] sm:$0xf]
  %v336 = vld [vmem:[%s5 + $0x30] sm:$0xf]
  %v337 = vld [vmem:[%s5 + $0x34] sm:$0xf]
  %v338 = vld [vmem:[%s5 + $0x38] sm:$0xf]
  %v339 = vld [vmem:[%s5 + $0x3c] sm:$0xf]
  %v340 = vld [vmem:[%s6] sm:$0x1]
  %v342 = vlaneseq
  %v343 = vshrl.u32 %v342, 7
  %v344 = vsub.s32 0, %v343
  %v345 = vrot.slane %v340, %v344
  %v351 = vunpack.c.l.b16 %v320
  %v352 = vunpack.c.l.b16 %v321
  %v353 = vunpack.c.l.b16 %v322
  %v354 = vunpack.c.l.b16 %v323
  %vm355 = vcmask 1041409
  %v356 = vsel %vm355, %v352, %v351
  %vm357 = vcmask 1042434
  %v358 = vsel %vm357, %v353, %v356
  %vm359 = vcmask 1043459
  %v360 = vsel %vm359, %v354, %v358
  %v361 = vpack.c.b16 %v360, %v360
  %v379 = vunpack.c.l.b16 %v324
  %v380 = vunpack.c.l.b16 %v325
  %v381 = vunpack.c.l.b16 %v326
  %v382 = vunpack.c.l.b16 %v327
  %v383 = vunpack.c.l.b16 %v328
  %v384 = vunpack.c.l.b16 %v329
  %v385 = vunpack.c.l.b16 %v330
  %v386 = vunpack.c.l.b16 %v331
  %v387 = vunpack.c.l.b16 %v332
  %v388 = vunpack.c.l.b16 %v333
  %v389 = vunpack.c.l.b16 %v334
  %v390 = vunpack.c.l.b16 %v335
  %v391 = vunpack.c.l.b16 %v336
  %v392 = vunpack.c.l.b16 %v337
  %v393 = vunpack.c.l.b16 %v338
  %v394 = vunpack.c.l.b16 %v339
  %v395 = vpack.c.b16 %v380, %v379
  %v396 = vpack.c.b16 %v382, %v381
  %v397 = vpack.c.b16 %v384, %v383
  %v398 = vpack.c.b16 %v386, %v385
  %v399 = vpack.c.b16 %v388, %v387
  %v400 = vpack.c.b16 %v390, %v389
  %v401 = vpack.c.b16 %v392, %v391
  %v402 = vpack.c.b16 %v394, %v393
  %411 = vmatprep.subr.bf16.mxu0 0
  %412 = vmatpush1.bf16.msra.mxu0 %v395
  %413 = vmatprep.subr.bf16.mxu0 0
  %414 = vmatpush1.bf16.msra.mxu0 %v396
  %415 = vmatprep.subr.bf16.mxu0 0
  %416 = vmatpush1.bf16.msra.mxu0 %v397
  %417 = vmatprep.subr.bf16.mxu0 0
  %418 = vmatpush1.bf16.msra.mxu0 %v398
  %419 = vmatprep.subr.bf16.mxu0 0
  %420 = vmatpush1.bf16.msra.mxu0 %v399
  %421 = vmatprep.subr.bf16.mxu0 0
  %422 = vmatpush1.bf16.msra.mxu0 %v400
  %423 = vmatprep.subr.bf16.mxu0 0
  %424 = vmatpush1.bf16.msra.mxu0 %v401
  %425 = vmatprep.subr.bf16.mxu0 0
  %426 = vmatpush1.bf16.msra.mxu0 %v402
  %427 = vmatprep.subr.bf16.mxu0 0
  %428 = vmatpush1.bf16.msra.mxu0 0
  %429 = vmatprep.subr.bf16.mxu0 0
  %430 = vmatpush1.bf16.msra.mxu0 0
  %431 = vmatprep.subr.bf16.mxu0 0
  %432 = vmatpush1.bf16.msra.mxu0 0
  %433 = vmatprep.subr.bf16.mxu0 0
  %434 = vmatpush1.bf16.msra.mxu0 0
  %435 = vmatprep.subr.bf16.mxu0 0
  %436 = vmatpush1.bf16.msra.mxu0 0
  %437 = vmatprep.subr.bf16.mxu0 0
  %438 = vmatpush1.bf16.msra.mxu0 0
  %439 = vmatprep.subr.bf16.mxu0 0
  %440 = vmatpush1.bf16.msra.mxu0 0
  %441 = vmatprep.subr.bf16.mxu0 0
  %442 = vmatpush1.bf16.msra.mxu0 0
  %443 = vmatprep.mubr.bf16.mxu0 0
  %444 = vmatmul.mubr.bf16.gmra.mrb[0].mxu0 %v361
  %v445 = vpop.f32.mrb[0].mxu0
  %v446 = vadd.f32 %v345, %v445
  %v447 = vpop.f32.mrb[0].mxu0
  %v448 = vpop.f32.mrb[0].mxu0
  %v449 = vpop.f32.mrb[0].mxu0
  %450 = vdwg.mxu0
  %v451 = vmax.f32 %v446, 0.0
  %v452 = vpack.c.bf16 %v451, %v451
  %v453 = vld [vmem:[%s7] sm:$0xf]
  %v454 = vld [vmem:[%s7 + $0x4] sm:$0xf]
  %v455 = vld [vmem:[%s7 + $0x8] sm:$0xf]
  %v456 = vld [vmem:[%s7 + $0xc] sm:$0xf]
  %v457 = vld [vmem:[%s8] sm:$0x1]
  %v459 = vlaneseq
  %v460 = vshrl.u32 %v459, 7
  %v461 = vsub.s32 0, %v460
  %v462 = vrot.slane %v457, %v461
  %v468 = vunpack.c.l.b16 %v453
  %v469 = vunpack.c.l.b16 %v454
  %v470 = vunpack.c.l.b16 %v455
  %v471 = vunpack.c.l.b16 %v456
  %v472 = vpack.c.b16 %v469, %v468
  %v473 = vpack.c.b16 %v471, %v470
  %v477 = vsel %vm146, %v452, 0
  %479 = vmatprep.subr.bf16.mxu0 0
  %480 = vmatpush1.bf16.msra.mxu0 %v472
  %481 = vmatprep.subr.bf16.mxu0 0
  %482 = vmatpush1.bf16.msra.mxu0 %v473
  %483 = vmatprep.subr.bf16.mxu0 0
  %484 = vmatpush1.bf16.msra.mxu0 0
  %485 = vmatprep.subr.bf16.mxu0 0
  %486 = vmatpush1.bf16.msra.mxu0 0
  %487 = vmatprep.subr.bf16.mxu0 0
  %488 = vmatpush1.bf16.msra.mxu0 0
  %489 = vmatprep.subr.bf16.mxu0 0
  %490 = vmatpush1.bf16.msra.mxu0 0
  %491 = vmatprep.subr.bf16.mxu0 0
  %492 = vmatpush1.bf16.msra.mxu0 0
  %493 = vmatprep.subr.bf16.mxu0 0
  %494 = vmatpush1.bf16.msra.mxu0 0
  %495 = vmatprep.subr.bf16.mxu0 0
  %496 = vmatpush1.bf16.msra.mxu0 0
  %497 = vmatprep.subr.bf16.mxu0 0
  %498 = vmatpush1.bf16.msra.mxu0 0
  %499 = vmatprep.subr.bf16.mxu0 0
  %500 = vmatpush1.bf16.msra.mxu0 0
  %501 = vmatprep.subr.bf16.mxu0 0
  %502 = vmatpush1.bf16.msra.mxu0 0
  %503 = vmatprep.subr.bf16.mxu0 0
  %504 = vmatpush1.bf16.msra.mxu0 0
  %505 = vmatprep.subr.bf16.mxu0 0
  %506 = vmatpush1.bf16.msra.mxu0 0
  %507 = vmatprep.subr.bf16.mxu0 0
  %508 = vmatpush1.bf16.msra.mxu0 0
  %509 = vmatprep.subr.bf16.mxu0 0
  %510 = vmatpush1.bf16.msra.mxu0 0
  %511 = vmatprep.mubr.bf16.mxu0 0
  %512 = vmatmul.mubr.bf16.gmra.mrb[0].mxu0 %v477
  %v513 = vpop.f32.mrb[0].mxu0
  %v514 = vadd.f32 %v462, %v513
  %v515 = vpop.f32.mrb[0].mxu0
  %v516 = vpop.f32.mrb[0].mxu0
  %v517 = vpop.f32.mrb[0].mxu0
  %518 = vdwg.mxu0
  %v519 = vpack.c.bf16 %v514, %v514
  %v520 = vld [vmem:[%s9] sm:$0xf]
  %v521 = vld [vmem:[%s9 + $0x4] sm:$0xf]
  %v522 = vld [vmem:[%s9 + $0x8] sm:$0xf]
  %v523 = vld [vmem:[%s9 + $0xc] sm:$0xf]
  %v524 = vld [vmem:[%s9 + $0x10] sm:$0xf]
  %v525 = vld [vmem:[%s9 + $0x14] sm:$0xf]
  %v526 = vld [vmem:[%s9 + $0x18] sm:$0xf]
  %v527 = vld [vmem:[%s9 + $0x1c] sm:$0xf]
  %v528 = vld [vmem:[%s10] sm:$0x1]
  %v530 = vlaneseq
  %v531 = vshrl.u32 %v530, 7
  %v532 = vsub.s32 0, %v531
  %v533 = vrot.slane %v528, %v532
  %v543 = vunpack.c.l.b16 %v520
  %v544 = vunpack.c.l.b16 %v521
  %v545 = vunpack.c.l.b16 %v522
  %v546 = vunpack.c.l.b16 %v523
  %v547 = vunpack.c.l.b16 %v524
  %v548 = vunpack.c.l.b16 %v525
  %v549 = vunpack.c.l.b16 %v526
  %v550 = vunpack.c.l.b16 %v527
  %v551 = vpack.c.b16 %v544, %v543
  %v552 = vpack.c.b16 %v546, %v545
  %v553 = vpack.c.b16 %v548, %v547
  %v554 = vpack.c.b16 %v550, %v549
  %v560 = vsel %vm151, %v519, 0
  %562 = vmatprep.subr.bf16.mxu0 0
  %563 = vmatpush1.bf16.msra.mxu0 %v551
  %564 = vmatprep.subr.bf16.mxu0 0
  %565 = vmatpush1.bf16.msra.mxu0 %v552
  %566 = vmatprep.subr.bf16.mxu0 0
  %567 = vmatpush1.bf16.msra.mxu0 %v553
  %568 = vmatprep.subr.bf16.mxu0 0
  %569 = vmatpush1.bf16.msra.mxu0 %v554
  %570 = vmatprep.subr.bf16.mxu0 0
  %571 = vmatpush1.bf16.msra.mxu0 0
  %572 = vmatprep.subr.bf16.mxu0 0
  %573 = vmatpush1.bf16.msra.mxu0 0
  %574 = vmatprep.subr.bf16.mxu0 0
  %575 = vmatpush1.bf16.msra.mxu0 0
  %576 = vmatprep.subr.bf16.mxu0 0
  %577 = vmatpush1.bf16.msra.mxu0 0
  %578 = vmatprep.subr.bf16.mxu0 0
  %579 = vmatpush1.bf16.msra.mxu0 0
  %580 = vmatprep.subr.bf16.mxu0 0
  %581 = vmatpush1.bf16.msra.mxu0 0
  %582 = vmatprep.subr.bf16.mxu0 0
  %583 = vmatpush1.bf16.msra.mxu0 0
  %584 = vmatprep.subr.bf16.mxu0 0
  %585 = vmatpush1.bf16.msra.mxu0 0
  %586 = vmatprep.subr.bf16.mxu0 0
  %587 = vmatpush1.bf16.msra.mxu0 0
  %588 = vmatprep.subr.bf16.mxu0 0
  %589 = vmatpush1.bf16.msra.mxu0 0
  %590 = vmatprep.subr.bf16.mxu0 0
  %591 = vmatpush1.bf16.msra.mxu0 0
  %592 = vmatprep.subr.bf16.mxu0 0
  %593 = vmatpush1.bf16.msra.mxu0 0
  %594 = vmatprep.mubr.bf16.mxu0 0
  %595 = vmatmul.mubr.bf16.gmra.mrb[0].mxu0 %v560
  %v596 = vpop.f32.mrb[0].mxu0
  %v597 = vadd.f32 %v533, %v596
  %v598 = vpop.f32.mrb[0].mxu0
  %v599 = vpop.f32.mrb[0].mxu0
  %v600 = vpop.f32.mrb[0].mxu0
  %601 = vdwg.mxu0
  %v602 = vlaneseq
  %v603 = vand.u32 %v602, 127
  %vm604 = vcmp.lt.s32.totalorder %v603, 2
  %vm605 = vcmp.ge.s32.totalorder %v603, 2
  %vm606 = vcmp.lt.s32.totalorder %v603, 6
  %vm607 = vmand %vm605, %vm606
  %v608 = vsel %vm607, 1, 0
  %vm609 = vcmp.eq.s32.totalorder %v608, 1
  %v610 = vsel %vm609, %v597, -1e+30
  %vm611 = vcmask 60416
  %v612 = vsel %vm611, %v610, -inf
  %613 = vmax.xlane.f32.xlu0 %v612
  %v614 = vpop.xlane.xlu0 %613
  %v615 = vsub.f32 %v610, %v614
  %v616 = vmul.f32 %v615, 1.442695
  %v617 = vpow.pop %v616
  %v618 = vsel %vm611, %v617, 0.0
  %619 = vadd.xlane.f32.xlu0 %v618
  %v620 = vpop.xlane.xlu0 %619
  %v621 = vrcp.pop %v620
  %v622 = vmul.f32 %v620, %v621
  %v623 = vsub.f32 2.0, %v622
  %v624 = vmul.f32 %v621, %v623
  %v625 = vmul.f32 %v617, %v624
  %v626 = vsel %vm604, 1, 0
  %vm627 = vcmp.eq.s32.totalorder %v626, 1
  %v628 = vsel %vm627, %v597, %v625
  %629 = vst.msk [vmem:[%s11] sm:$0xf] %vm611, %v628
  // Predicated region
  $region46: #{eann_text_forward.1} parent=0 // pred_check
    _
  $region47: #{eann_text_forward.1} parent=0 // pred_check_branch
    %631 = sbr.rel (0) target = $region49
  $region48: #{eann_text_forward.1} parent=0 // pred_region
    _
  $region49: #{eann_text_forward.1} parent=0 // pred_fallthru
    _
  // Predicated region
  $region50: #{eann_text_forward.1} parent=0 // pred_check
    _
  $region51: #{eann_text_forward.1} parent=0 // pred_check_branch
    %633 = sbr.rel (0) target = $region53
  $region52: #{eann_text_forward.1} parent=0 // pred_region
    _
  $region53: #{eann_text_forward.1} parent=0 // pred_fallthru
    _

</llo_original>
